<compile_context>
chip_gen: v5e
topology: v5e:2x2
jax: 0.10.0
libtpu: 0.0.40
codegen_flags: <defaults>
</compile_context>

<pallas_src>
import functools

import jax
import jax.numpy as jnp
from jax.experimental import pallas as pl
from jax.experimental.pallas import tpu as pltpu


def _scratch_ctr_kernel(x_ref, y_ref, w1t_ref, b1_ref, w2_ref, b2_ref,
                        partial_ref, acc_ref, *, inv_batch):
    """One batch tile of backbone(data) + BCE-with-logits (lane-dense epilogue)."""
    i = pl.program_id(1)

    @pl.when(i == 0)
    def _init():
        acc_ref[...] = jnp.zeros_like(acc_ref)

    # ---- backbone(data): 2-layer MLP producing logits ----
    # Cast to bf16 in-kernel (data travels HBM->VMEM as f32 only once).
    x = x_ref[...].astype(jnp.bfloat16)                      # [TB, F] bf16

    # Layer 1 computed transposed so the batch ends up on the lane axis:
    # hT[h, b] = sum_f w1[f, h] * x[b, f]   (bf16 x bf16 -> f32 on the MXU)
    ht = jax.lax.dot_general(
        w1t_ref[...], x,
        dimension_numbers=(((1,), (1,)), ((), ())),          # NT contraction on F
        preferred_element_type=jnp.float32)                  # [H, TB] f32
    ht = jnp.maximum(ht + b1_ref[...], 0.0)                  # bias + ReLU (VPU)

    # Layer 2 has output width 1: contraction over H is a sublane reduce, so z
    # stays lane-dense [1, TB] (no [TB, 1] column, no 1-output-lane MXU pass).
    z = jnp.sum(ht * w2_ref[...], axis=0, keepdims=True) + b2_ref[...]   # [1, TB]

    # ---- backbone.get_loss(output, labels): stable BCE-with-logits (f32) ----
    y = y_ref[...]                                           # [1, TB] lane-dense
    per_ex = jnp.maximum(z, 0.0) - z * y + jnp.log1p(jnp.exp(-jnp.abs(z)))
    acc_ref[...] += per_ex                                   # lane-dense accumulator

    @pl.when(i == pl.num_programs(1) - 1)
    def _finalize():
        # single cross-lane reduce + compile-time 1/B scale (mean over batch)
        partial_ref[...] = jnp.sum(acc_ref[...], axis=1, keepdims=True) * inv_batch


def _pick_block_b(per_core_b, feat, hidden, vmem_budget_bytes=12 << 20):
    """Largest 128-multiple batch tile whose working set fits a VMEM budget."""
    # double-buffered f32 data tile + f32 [H, TB] hidden intermediate dominate
    bytes_per_row = (2 * feat + hidden) * 4 + 16
    cap = max(128, (vmem_budget_bytes // bytes_per_row) // 128 * 128)
    bb = min(per_core_b, cap)
    while per_core_b % bb:
        bb -= 128
    return bb


def scratch_forward(data, labels, params, *, block_b=None, num_partials=None):
    """Equivalent of Scratch.forward(data, labels) for the 'ctr' task.

    Returns (loss, base_loss_detached, zero) matching the PyTorch tuple.
    """
    w1, b1, w2, b2 = params              # w1 [F,H], b1 [H], w2 [H], b2 []
    B, F = data.shape
    H = w1.shape[1]

    # Leading "parallel" axis so v7x's second TensorCore gets half the batch
    # (sequential & harmless on single-core v5e/v6e).
    if num_partials is None:
        num_partials = 2 if B % 256 == 0 else 1
    assert B % (num_partials * 128) == 0, "batch must tile by 128 per core"
    per_core_b = B // num_partials

    if block_b is None:
        block_b = _pick_block_b(per_core_b, F, H)
    assert per_core_b % block_b == 0 and block_b % 128 == 0
    inner_steps = per_core_b // block_b
    grid = (num_partials, inner_steps)

    # Layout plumbing on the tiny resident weights only (data stays untouched).
    w1t = jnp.transpose(w1).astype(jnp.bfloat16)   # [H, F] bf16 into the MXU
    b1c = b1.reshape(H, 1).astype(jnp.float32)
    w2c = w2.reshape(H, 1).astype(jnp.float32)
    b2m = jnp.asarray(b2, jnp.float32).reshape(1, 1)
    x = data.astype(jnp.float32)                   # f32; bf16 cast happens in-kernel
    y = labels.astype(jnp.float32).reshape(1, B)   # lane-dense labels (free reshape)

    kernel = functools.partial(_scratch_ctr_kernel, inv_batch=1.0 / B)

    cost = pl.CostEstimate(
        flops=2 * B * F * H + 6 * B * H + 8 * B,
        transcendentals=2 * B,
        bytes_accessed=(x.size * 4 + y.size * 4 + w1t.size * 2
                        + (b1c.size + w2c.size + b2m.size + num_partials) * 4),
    )

    partials = pl.pallas_call(
        kernel,
        out_shape=jax.ShapeDtypeStruct((num_partials, 1, 1), jnp.float32),
        grid=grid,
        in_specs=[
            pl.BlockSpec((block_b, F), lambda c, i: (c * inner_steps + i, 0)),  # data
            pl.BlockSpec((1, block_b), lambda c, i: (0, c * inner_steps + i)),  # labels
            pl.BlockSpec((H, F), lambda c, i: (0, 0)),    # w1^T (resident)
            pl.BlockSpec((H, 1), lambda c, i: (0, 0)),    # b1 column (resident)
            pl.BlockSpec((H, 1), lambda c, i: (0, 0)),    # w2 column (resident)
            pl.BlockSpec((1, 1), lambda c, i: (0, 0)),    # b2 (resident)
        ],
        out_specs=pl.BlockSpec((None, 1, 1), lambda c, i: (c, 0, 0)),
        scratch_shapes=[pltpu.VMEM((1, block_b), jnp.float32)],  # lane-dense loss acc
        compiler_params=pltpu.CompilerParams(
            dimension_semantics=("parallel", "arbitrary"),
        ),
        cost_estimate=cost,
    )(x, y, w1t, b1c, w2c, b2m)

    loss = jnp.sum(partials)                 # combine per-core partial means

    # TODO(synk): pl.pallas_call has no autodiff rule; wrap in jax.custom_vjp with
    # a fused backward kernel if this loss must be differentiated for training.
    base_loss = jax.lax.stop_gradient(loss)  # base_loss.detach()
    zero = jnp.float32(0.0)                  # torch.tensor(0.0)
    return loss, base_loss, zero


def init_backbone_params(key, num_features, hidden):
    k1, k2, k3, k4 = jax.random.split(key, 4)
    w1 = jax.random.normal(k1, (num_features, hidden), jnp.float32) * 0.05
    b1 = jax.random.normal(k2, (hidden,), jnp.float32) * 0.01
    w2 = jax.random.normal(k3, (hidden,), jnp.float32) * 0.05
    b2 = jax.random.normal(k4, (), jnp.float32) * 0.01
    return (w1, b1, w2, b2)


if __name__ == "__main__":
    # Lane-dense CTR-style shapes: F and H multiples of 128; batch tiled by 128.
    B, F, H = 256, 128, 128

    root = jax.random.PRNGKey(0)
    k_params, k_data, k_labels = jax.random.split(root, 3)

    params = init_backbone_params(k_params, F, H)
    data = jax.random.normal(k_data, (B, F), jnp.float32)
    labels = jax.random.bernoulli(k_labels, 0.5, (B, 1)).astype(jnp.float32)

    loss, base_loss, zero = scratch_forward(data, labels, params)
    jax.block_until_ready((loss, base_loss, zero))

    # Pure-JAX reference (same bf16 matmul operands, f32 loss math).
    w1, b1, w2, b2 = params
    h_ref = jnp.maximum(
        jnp.dot(data.astype(jnp.bfloat16), w1.astype(jnp.bfloat16),
                preferred_element_type=jnp.float32) + b1[None, :], 0.0)
    z_ref = jnp.sum(h_ref * w2[None, :], axis=-1, keepdims=True) + b2
    ref = jnp.mean(jnp.maximum(z_ref, 0.0) - z_ref * labels
                   + jnp.log1p(jnp.exp(-jnp.abs(z_ref))))

    # sanity: tuple layout matches the module and the fused loss matches the ref
    assert jnp.isfinite(loss) and zero == 0.0 and base_loss == loss
    assert jnp.allclose(loss, ref, rtol=2e-2, atol=1e-3), (float(loss), float(ref))

    print("KERNEL_OK")
</pallas_src>

<mosaic_0001>
module attributes {stable_mosaic.version = 11 : i64} {
  func.func @_scratch_ctr_kernel(%arg0: i32, %arg1: i32, %arg2: memref<128x128xf32, #tpu.memory_space<vmem>>, %arg3: memref<1x128xf32, #tpu.memory_space<vmem>>, %arg4: memref<128x128xbf16, #tpu.memory_space<vmem>>, %arg5: memref<128x1xf32, #tpu.memory_space<vmem>>, %arg6: memref<128x1xf32, #tpu.memory_space<vmem>>, %arg7: memref<1x1xf32, #tpu.memory_space<vmem>>, %arg8: memref<1x1x1xf32, #tpu.memory_space<vmem>>, %arg9: memref<1x128xf32, #tpu.memory_space<vmem>>) attributes {dimension_semantics = [#tpu.dimension_semantics<parallel>, #tpu.dimension_semantics<arbitrary>], iteration_bounds = array<i64: 2, 1>, scalar_prefetch = 0 : i64, scratch_operands = 1 : i64, tpu.core_type = #tpu.core_type<tc>, window_params = [{transform_indices = @transform_0, window_bounds = array<i64: 128, 128>}, {transform_indices = @transform_1, window_bounds = array<i64: 1, 128>}, {pipeline_mode = #tpu.pipeline_mode<synchronous>, transform_indices = @transform_2, window_bounds = array<i64: 128, 128>}, {pipeline_mode = #tpu.pipeline_mode<synchronous>, transform_indices = @transform_3, window_bounds = array<i64: 128, 1>}, {pipeline_mode = #tpu.pipeline_mode<synchronous>, transform_indices = @transform_4, window_bounds = array<i64: 128, 1>}, {pipeline_mode = #tpu.pipeline_mode<synchronous>, transform_indices = @transform_5, window_bounds = array<i64: 1, 1>}, {transform_indices = @transform_6, window_bounds = array<i64: 1, 1, 1>}]} {
    %c0_i32 = arith.constant 0 : i32
    %0 = arith.cmpi eq, %arg1, %c0_i32 : i32
    %1 = arith.extui %0 : i1 to i32
    %c0_i32_0 = arith.constant 0 : i32
    %2 = arith.cmpi ne, %1, %c0_i32_0 : i32
    scf.if %2 {
      %cst_22 = arith.constant 0.000000e+00 : f32
      %37 = vector.broadcast %cst_22 : f32 to vector<1x128xf32>
      %c0_23 = arith.constant 0 : index
      %c0_24 = arith.constant 0 : index
      %38 = vector.load %arg9[%c0_23, %c0_24] : memref<1x128xf32, #tpu.memory_space<vmem>>, vector<1x128xf32>
      tpu.vector_store %arg9[%c0_23, %c0_24], %37 {strides = array<i32>} : memref<1x128xf32, #tpu.memory_space<vmem>>, vector<1x128xf32>,
    } else {
    }
    %c0 = arith.constant 0 : index
    %c0_1 = arith.constant 0 : index
    %3 = vector.load %arg2[%c0, %c0_1] : memref<128x128xf32, #tpu.memory_space<vmem>>, vector<128x128xf32>
    %4 = arith.truncf %3 : vector<128x128xf32> to vector<128x128xbf16>
    %c0_2 = arith.constant 0 : index
    %c0_3 = arith.constant 0 : index
    %5 = vector.load %arg4[%c0_2, %c0_3] : memref<128x128xbf16, #tpu.memory_space<vmem>>, vector<128x128xbf16>
    %cst = arith.constant dense<0.000000e+00> : vector<128x128xf32>
    %6 = tpu.matmul %5, %4, %cst {dimension_numbers = #tpu.dot_dimension_numbers<[1], [1], [0], [0], [0, 0, 1, 0], [], []>} : vector<128x128xbf16>, vector<128x128xbf16>, vector<128x128xf32> -> vector<128x128xf32>
    %c0_4 = arith.constant 0 : index
    %c0_5 = arith.constant 0 : index
    %7 = vector.load %arg5[%c0_4, %c0_5] : memref<128x1xf32, #tpu.memory_space<vmem>>, vector<128x1xf32>
    %8 = vector.broadcast %7 : vector<128x1xf32> to vector<128x128xf32>
    %9 = arith.addf %6, %8 : vector<128x128xf32>
    %cst_6 = arith.constant 0.000000e+00 : f32
    %10 = vector.broadcast %cst_6 : f32 to vector<128x128xf32>
    %11 = arith.maximumf %9, %10 : vector<128x128xf32>
    %c0_7 = arith.constant 0 : index
    %c0_8 = arith.constant 0 : index
    %12 = vector.load %arg6[%c0_7, %c0_8] : memref<128x1xf32, #tpu.memory_space<vmem>>, vector<128x1xf32>
    %13 = vector.broadcast %12 : vector<128x1xf32> to vector<128x128xf32>
    %14 = arith.mulf %11, %13 : vector<128x128xf32>
    %cst_9 = arith.constant dense<0.000000e+00> : vector<128xf32>
    %15 = vector.multi_reduction <add>, %14, %cst_9 [0] : vector<128x128xf32> to vector<128xf32>
    %16 = vector.shape_cast %15 : vector<128xf32> to vector<1x128xf32>
    %c0_10 = arith.constant 0 : index
    %c0_11 = arith.constant 0 : index
    %17 = vector.load %arg7[%c0_10, %c0_11] : memref<1x1xf32, #tpu.memory_space<vmem>>, vector<1x1xf32>
    %18 = vector.broadcast %17 : vector<1x1xf32> to vector<1x128xf32>
    %19 = arith.addf %16, %18 : vector<1x128xf32>
    %c0_12 = arith.constant 0 : index
    %c0_13 = arith.constant 0 : index
    %20 = vector.load %arg3[%c0_12, %c0_13] : memref<1x128xf32, #tpu.memory_space<vmem>>, vector<1x128xf32>
    %cst_14 = arith.constant 0.000000e+00 : f32
    %21 = vector.broadcast %cst_14 : f32 to vector<1x128xf32>
    %22 = arith.maximumf %19, %21 : vector<1x128xf32>
    %23 = arith.mulf %19, %20 : vector<1x128xf32>
    %24 = arith.subf %22, %23 : vector<1x128xf32>
    %25 = math.absf %19 : vector<1x128xf32>
    %cst_15 = arith.constant 0.000000e+00 : f32
    %26 = vector.broadcast %cst_15 : f32 to vector<1x128xf32>
    %27 = arith.subf %26, %25 : vector<1x128xf32>
    %28 = math.exp %27 : vector<1x128xf32>
    %29 = math.log1p %28 : vector<1x128xf32>
    %30 = arith.addf %24, %29 : vector<1x128xf32>
    %c0_16 = arith.constant 0 : index
    %c0_17 = arith.constant 0 : index
    %31 = vector.load %arg9[%c0_16, %c0_17] : memref<1x128xf32, #tpu.memory_space<vmem>>, vector<1x128xf32>
    %32 = arith.addf %31, %30 : vector<1x128xf32>
    %c0_18 = arith.constant 0 : index
    %c0_19 = arith.constant 0 : index
    %33 = vector.load %arg9[%c0_18, %c0_19] : memref<1x128xf32, #tpu.memory_space<vmem>>, vector<1x128xf32>
    tpu.vector_store %arg9[%c0_18, %c0_19], %32 {strides = array<i32>} : memref<1x128xf32, #tpu.memory_space<vmem>>, vector<1x128xf32>,
    %c0_i32_20 = arith.constant 0 : i32
    %34 = arith.cmpi eq, %arg1, %c0_i32_20 : i32
    %35 = arith.extui %34 : i1 to i32
    %c0_i32_21 = arith.constant 0 : i32
    %36 = arith.cmpi ne, %35, %c0_i32_21 : i32
    scf.if %36 {
      %c0_22 = arith.constant 0 : index
      %c0_23 = arith.constant 0 : index
      %37 = vector.load %arg9[%c0_22, %c0_23] : memref<1x128xf32, #tpu.memory_space<vmem>>, vector<1x128xf32>
      %cst_24 = arith.constant dense<0.000000e+00> : vector<1xf32>
      %38 = vector.multi_reduction <add>, %37, %cst_24 [1] : vector<1x128xf32> to vector<1xf32>
      %39 = vector.shape_cast %38 : vector<1xf32> to vector<1x1xf32>
      %cst_25 = arith.constant 3.906250e-03 : f32
      %40 = vector.broadcast %cst_25 : f32 to vector<1x1xf32>
      %41 = arith.mulf %39, %40 : vector<1x1xf32>
      %c0_26 = arith.constant 0 : index
      %c0_27 = arith.constant 0 : index
      %c0_28 = arith.constant 0 : index
      %42 = vector.load %arg8[%c0_26, %c0_27, %c0_28] : memref<1x1x1xf32, #tpu.memory_space<vmem>>, vector<1x1x1xf32>
      %43 = vector.shape_cast %42 : vector<1x1x1xf32> to vector<1x1xf32>
      %44 = vector.shape_cast %41 : vector<1x1xf32> to vector<1x1x1xf32>
      tpu.vector_store %arg8[%c0_26, %c0_27, %c0_28], %44 {strides = array<i32>} : memref<1x1x1xf32, #tpu.memory_space<vmem>>, vector<1x1x1xf32>,
    } else {
    }
    return
  }
  func.func @transform_0(%arg0: i32, %arg1: i32) -> (i32, i32) {
    %c1_i32 = arith.constant 1 : i32
    %0 = arith.muli %arg0, %c1_i32 : i32
    %1 = arith.addi %0, %arg1 : i32
    %c0_i32 = arith.constant 0 : i32
    %c0_i32_0 = arith.constant 0 : i32
    return %1, %c0_i32 : i32, i32
  }
  func.func @transform_1(%arg0: i32, %arg1: i32) -> (i32, i32) {
    %c1_i32 = arith.constant 1 : i32
    %0 = arith.muli %arg0, %c1_i32 : i32
    %1 = arith.addi %0, %arg1 : i32
    %c0_i32 = arith.constant 0 : i32
    %c0_i32_0 = arith.constant 0 : i32
    return %c0_i32, %1 : i32, i32
  }
  func.func @transform_2(%arg0: i32, %arg1: i32) -> (i32, i32) {
    %c0_i32 = arith.constant 0 : i32
    %c0_i32_0 = arith.constant 0 : i32
    %c0_i32_1 = arith.constant 0 : i32
    return %c0_i32, %c0_i32_0 : i32, i32
  }
  func.func @transform_3(%arg0: i32, %arg1: i32) -> (i32, i32) {
    %c0_i32 = arith.constant 0 : i32
    %c0_i32_0 = arith.constant 0 : i32
    %c0_i32_1 = arith.constant 0 : i32
    return %c0_i32, %c0_i32_0 : i32, i32
  }
  func.func @transform_4(%arg0: i32, %arg1: i32) -> (i32, i32) {
    %c0_i32 = arith.constant 0 : i32
    %c0_i32_0 = arith.constant 0 : i32
    %c0_i32_1 = arith.constant 0 : i32
    return %c0_i32, %c0_i32_0 : i32, i32
  }
  func.func @transform_5(%arg0: i32, %arg1: i32) -> (i32, i32) {
    %c0_i32 = arith.constant 0 : i32
    %c0_i32_0 = arith.constant 0 : i32
    %c0_i32_1 = arith.constant 0 : i32
    return %c0_i32, %c0_i32_0 : i32, i32
  }
  func.func @transform_6(%arg0: i32, %arg1: i32) -> (i32, i32, i32) {
    %c0_i32 = arith.constant 0 : i32
    %c0_i32_0 = arith.constant 0 : i32
    %c0_i32_1 = arith.constant 0 : i32
    return %arg0, %c0_i32, %c0_i32_0 : i32, i32, i32
  }
}

</mosaic_0001>

<llo_original>
// kernel: tpu_custom_call.1
$region0: #{tpu_custom_call.1}
  #allocation0 [shape = 'u32[]', space=smem, size = 0x4, offset = 0x4, fixed_abs, tag = 'smem constant byte address 0x4 - core index']
  #allocation1 [shape = 'u32[72,128]{1,0:T(1,128)}', space=vmem, size = 0x9000, scoped, tag = 'internal scratch']
  #allocation2 [shape = 'f32[1,128]{1,0:T(1,128)}', space=vmem, size = 0x200, scoped, tag = 'scratch operand']
  #allocation3 [shape = 'f32[1,1]{1,0:T(1,128)S(1)}', space=vmem, size = 0x200, scoped, tag = 'scoped memory for tpu_custom_call.1']
  %s0 = inlined_call_operand.vmem [shape: f32[256,128], index: 0, kind: input, shape index: {}]
  %s1 = inlined_call_operand.vmem [shape: f32[1,256], index: 1, kind: input, shape index: {}]
  %s2 = inlined_call_operand.hbm [shape: bf16[128,128], index: 2, kind: input, shape index: {}]
  %s3 = inlined_call_operand.vmem [shape: f32[128,1], index: 3, kind: input, shape index: {}]
  %s4 = inlined_call_operand.vmem [shape: f32[128,1], index: 4, kind: input, shape index: {}]
  %s5 = inlined_call_operand.<no memory space> [shape: f32[1,1], index: 5, kind: input, shape index: {}]
  %s6 = inlined_call_operand.vmem [shape: f32[2,1,1], index: 6, kind: output, shape index: {}]
  %s7 = sld [smem:[#allocation0]]
  $region69: #{tpu_custom_call.1} parent=0
    _
  %s9 = ssub.s32 1, %s7
  %s10 = scalar_select 0, %s9, %s7
  %v11 = vstv %s5
  %12 = vst [vmem:[#allocation3] sm:$0x1] %v11
  $region1: #{tpu_custom_call.1} parent=0
    #allocation4 [shape = 'u8[32768]{0}', space=vmem, size = 0x8000, scoped, tag = 'input window, operand 2, single buffered']
    #allocation5 [shape = 's32[2]{0}', space=sflag, size = 0x8, scoped, tag = 'scoped memory for tpu_custom_call.1']
    %13 = vsyncpa [#allocation5], 0
    loop: start=0, step=1, limit=4
    $region2: #{tpu_custom_call.1} parent=1 // loop_pre_header
      _
    $region3: #{tpu_custom_call.1} parent=1 // loop_header
      %s15 = sphi 0, %s19
      %p16 = scmp.ge.s32.totalorder %s15, 4
      %s22 = sphi 0, %s34
      %s23 = sphi 0, %s30
      %s24 = sphi 0, %s22
      %s25 = sphi 0, %s23
      %s26 = sphi 0, %s24
      %s27 = sphi 0, %s25
      %s39 = sphi 0, %s41
      %s42 = sphi 0, %s39
      %s43 = sphi 0, %s42
      %s59 = sphi 0, %s43
      %s67 = sphi 0, %s69
      %s70 = sphi 0, %s67
      %s71 = sphi 0, %s70
      %s87 = sphi 0, %s71
      %s91 = sphi 0, %s91
      %s93 = sphi 0, %s91
      %s94 = sphi 0, %s93
      %s108 = sphi 0, %s94
      %s112 = sphi 0, %s112
      %s114 = sphi 0, %s112
      %s115 = sphi 0, %s114
      %s129 = sphi 0, %s115
      %s133 = sphi 0, %s133
      %s135 = sphi 0, %s133
      %s136 = sphi 0, %s135
      %s150 = sphi 0, %s136
      %s154 = sphi 0, %s154
      %s156 = sphi 0, %s154
      %s157 = sphi 0, %s156
      %s171 = sphi 0, %s157
      %s177 = sphi 0, %s179
      %s180 = sphi 0, %s177
      %s181 = sphi 0, %s180
      %s197 = sphi 0, %s181
    $region4: #{tpu_custom_call.1} parent=1 // loop_header_branch
      %18 = sbr.rel (%p16) target = $region8
    $region5: #{tpu_custom_call.1} parent=1 // loop_body
      %s20 = ssub.s32 %s15, 1
      %s21 = ssub.s32 %s15, 2
      %s28 = sadd.s32 1, %s23
      %p29 = scmp.ge.s32.totalorder %s28, 1
      %s30 = scalar_select %p29, 0, %s28
      %s31 = sadd.s32 1, %s22
      %s32 = scalar_select %p29, %s31, %s22
      %p33 = scmp.ge.s32.totalorder %s32, 2
      %s34 = scalar_select %p33, 0, %s32
      %s35 = sadd.s32 %s22, %s23
      %s36 = sadd.s32 %s34, %s30
      %s37 = ssub.s32 %s35, %s36
      %p38 = scmp.eq.s32.totalorder %s37, 0
      %s40 = sadd.s32 %s39, 1
      %s41 = scalar_select %p38, %s39, %s40
      %p44 = pneg %p38
      %p45 = scmp.eq.s32.totalorder %s15, 1
      %p46 = por %p44, %p45
      %p47 = scmp.ne.s32.totalorder %s39, %s42
      %p48 = scmp.eq.s32.totalorder %s15, 0
      %p49 = por %p47, %p48
      %p50 = scmp.ne.s32.totalorder %s39, %s42
      %p51 = scmp.eq.s32.totalorder %s20, 1
      %p52 = por %p50, %p51
      %p53 = scmp.ne.s32.totalorder %s42, %s43
      %p54 = scmp.eq.s32.totalorder %s20, 0
      %p55 = por %p53, %p54
      %p56 = scmp.ne.s32.totalorder %s42, %s43
      %p57 = scmp.eq.s32.totalorder %s21, 1
      %p58 = por %p56, %p57
      %p60 = scmp.ne.s32.totalorder %s43, %s59
      %p61 = scmp.eq.s32.totalorder %s21, 0
      %p62 = por %p60, %p61
      %s63 = sadd.s32 %s22, %s23
      %s64 = sadd.s32 %s34, %s30
      %s65 = ssub.s32 %s63, %s64
      %p66 = scmp.eq.s32.totalorder %s65, 0
      %s68 = sadd.s32 %s67, 1
      %s69 = scalar_select %p66, %s67, %s68
      %p72 = pneg %p66
      %p73 = scmp.eq.s32.totalorder %s15, 1
      %p74 = por %p72, %p73
      %p75 = scmp.ne.s32.totalorder %s67, %s70
      %p76 = scmp.eq.s32.totalorder %s15, 0
      %p77 = por %p75, %p76
      %p78 = scmp.ne.s32.totalorder %s67, %s70
      %p79 = scmp.eq.s32.totalorder %s20, 1
      %p80 = por %p78, %p79
      %p81 = scmp.ne.s32.totalorder %s70, %s71
      %p82 = scmp.eq.s32.totalorder %s20, 0
      %p83 = por %p81, %p82
      %p84 = scmp.ne.s32.totalorder %s70, %s71
      %p85 = scmp.eq.s32.totalorder %s21, 1
      %p86 = por %p84, %p85
      %p88 = scmp.ne.s32.totalorder %s71, %s87
      %p89 = scmp.eq.s32.totalorder %s21, 0
      %p90 = por %p88, %p89
      %s92 = sadd.s32 %s91, 1
      %p95 = scmp.eq.s32.totalorder %s15, 1
      %p96 = scmp.ne.s32.totalorder %s91, %s93
      %p97 = scmp.eq.s32.totalorder %s15, 0
      %p98 = por %p96, %p97
      %p99 = scmp.ne.s32.totalorder %s91, %s93
      %p100 = scmp.eq.s32.totalorder %s20, 1
      %p101 = por %p99, %p100
      %p102 = scmp.ne.s32.totalorder %s93, %s94
      %p103 = scmp.eq.s32.totalorder %s20, 0
      %p104 = por %p102, %p103
      %p105 = scmp.ne.s32.totalorder %s93, %s94
      %p106 = scmp.eq.s32.totalorder %s21, 1
      %p107 = por %p105, %p106
      %p109 = scmp.ne.s32.totalorder %s94, %s108
      %p110 = scmp.eq.s32.totalorder %s21, 0
      %p111 = por %p109, %p110
      %s113 = sadd.s32 %s112, 1
      %p116 = scmp.eq.s32.totalorder %s15, 1
      %p117 = scmp.ne.s32.totalorder %s112, %s114
      %p118 = scmp.eq.s32.totalorder %s15, 0
      %p119 = por %p117, %p118
      %p120 = scmp.ne.s32.totalorder %s112, %s114
      %p121 = scmp.eq.s32.totalorder %s20, 1
      %p122 = por %p120, %p121
      %p123 = scmp.ne.s32.totalorder %s114, %s115
      %p124 = scmp.eq.s32.totalorder %s20, 0
      %p125 = por %p123, %p124
      %p126 = scmp.ne.s32.totalorder %s114, %s115
      %p127 = scmp.eq.s32.totalorder %s21, 1
      %p128 = por %p126, %p127
      %p130 = scmp.ne.s32.totalorder %s115, %s129
      %p131 = scmp.eq.s32.totalorder %s21, 0
      %p132 = por %p130, %p131
      %s134 = sadd.s32 %s133, 1
      %p137 = scmp.eq.s32.totalorder %s15, 1
      %p138 = scmp.ne.s32.totalorder %s133, %s135
      %p139 = scmp.eq.s32.totalorder %s15, 0
      %p140 = por %p138, %p139
      %p141 = scmp.ne.s32.totalorder %s133, %s135
      %p142 = scmp.eq.s32.totalorder %s20, 1
      %p143 = por %p141, %p142
      %p144 = scmp.ne.s32.totalorder %s135, %s136
      %p145 = scmp.eq.s32.totalorder %s20, 0
      %p146 = por %p144, %p145
      %p147 = scmp.ne.s32.totalorder %s135, %s136
      %p148 = scmp.eq.s32.totalorder %s21, 1
      %p149 = por %p147, %p148
      %p151 = scmp.ne.s32.totalorder %s136, %s150
      %p152 = scmp.eq.s32.totalorder %s21, 0
      %p153 = por %p151, %p152
      %s155 = sadd.s32 %s154, 1
      %p158 = scmp.eq.s32.totalorder %s15, 1
      %p159 = scmp.ne.s32.totalorder %s154, %s156
      %p160 = scmp.eq.s32.totalorder %s15, 0
      %p161 = por %p159, %p160
      %p162 = scmp.ne.s32.totalorder %s154, %s156
      %p163 = scmp.eq.s32.totalorder %s20, 1
      %p164 = por %p162, %p163
      %p165 = scmp.ne.s32.totalorder %s156, %s157
      %p166 = scmp.eq.s32.totalorder %s20, 0
      %p167 = por %p165, %p166
      %p168 = scmp.ne.s32.totalorder %s156, %s157
      %p169 = scmp.eq.s32.totalorder %s21, 1
      %p170 = por %p168, %p169
      %p172 = scmp.ne.s32.totalorder %s157, %s171
      %p173 = scmp.eq.s32.totalorder %s21, 0
      %p174 = por %p172, %p173
      %s175 = ssub.s32 %s22, %s34
      %p176 = scmp.eq.s32.totalorder %s175, 0
      %s178 = sadd.s32 %s177, 1
      %s179 = scalar_select %p176, %s177, %s178
      %p182 = pneg %p176
      %p183 = scmp.eq.s32.totalorder %s15, 1
      %p184 = por %p182, %p183
      %p185 = scmp.ne.s32.totalorder %s177, %s180
      %p186 = scmp.eq.s32.totalorder %s15, 0
      %p187 = por %p185, %p186
      %p188 = scmp.ne.s32.totalorder %s177, %s180
      %p189 = scmp.eq.s32.totalorder %s20, 1
      %p190 = por %p188, %p189
      %p191 = scmp.ne.s32.totalorder %s180, %s181
      %p192 = scmp.eq.s32.totalorder %s20, 0
      %p193 = por %p191, %p192
      %p194 = scmp.ne.s32.totalorder %s180, %s181
      %p195 = scmp.eq.s32.totalorder %s21, 1
      %p196 = por %p194, %p195
      %p198 = scmp.ne.s32.totalorder %s181, %s197
      %p199 = scmp.eq.s32.totalorder %s21, 0
      %p200 = por %p198, %p199
      %p201 = scmp.le.s32.totalorder 1, %s15
      %p202 = scmp.lt.s32.totalorder %s15, 3
      %p203 = pnand %p201, %p202
      %p204 = pneg %p203
      // Predicated region
      $region9: #{tpu_custom_call.1} parent=5 // pred_check
        _
      $region10: #{tpu_custom_call.1} parent=5 // pred_check_branch
        %206 = sbr.rel (%p203) target = $region12
      $region11: #{tpu_custom_call.1} parent=5 // pred_region
        %s207 = ssub.s32 %s15, 1
        // Predicated region
        $region13: #{tpu_custom_call.1} parent=11 // pred_check
          %p208 = pneg %p104
        $region14: #{tpu_custom_call.1} parent=11 // pred_check_branch
          %210 = sbr.rel (%p208) target = $region16
        $region15: #{tpu_custom_call.1} parent=11 // pred_region
          %212 = vsyncadd [#allocation5], 0
          %s213 = sshll.u32 %s2, 4
          %s214 = int_to_ptr.hbm [resolvable:$true] %s213
          %s215 = sshll.u32 [#allocation4], 4
          %s216 = int_to_ptr.vmem [resolvable:$true] %s215
          %221 = dma.hbm_to_vmem [thread:$0]  %s214, 1024, %s216, [#allocation5], 64, 64, 4
        $region16: #{tpu_custom_call.1} parent=11 // pred_fallthru
          _
        // Predicated region
        $region17: #{tpu_custom_call.1} parent=11 // pred_check
          %p222 = pneg %p125
        $region18: #{tpu_custom_call.1} parent=11 // pred_check_branch
          %224 = sbr.rel (%p222) target = $region20
        $region19: #{tpu_custom_call.1} parent=11 // pred_region
          _
        $region20: #{tpu_custom_call.1} parent=11 // pred_fallthru
          _
        // Predicated region
        $region21: #{tpu_custom_call.1} parent=11 // pred_check
          %p225 = pneg %p146
        $region22: #{tpu_custom_call.1} parent=11 // pred_check_branch
          %227 = sbr.rel (%p225) target = $region24
        $region23: #{tpu_custom_call.1} parent=11 // pred_region
          _
        $region24: #{tpu_custom_call.1} parent=11 // pred_fallthru
          _
        // Predicated region
        $region25: #{tpu_custom_call.1} parent=11 // pred_check
          %p228 = pneg %p167
        $region26: #{tpu_custom_call.1} parent=11 // pred_check_branch
          %230 = sbr.rel (%p228) target = $region28
        $region27: #{tpu_custom_call.1} parent=11 // pred_region
          _
        $region28: #{tpu_custom_call.1} parent=11 // pred_fallthru
          _
      $region12: #{tpu_custom_call.1} parent=5 // pred_fallthru
        _
      %p231 = scmp.lt.s32.totalorder %s15, 2
      // Predicated region
      $region29: #{tpu_custom_call.1} parent=5 // pred_check
        %p232 = pneg %p231
      $region30: #{tpu_custom_call.1} parent=5 // pred_check_branch
        %234 = sbr.rel (%p232) target = $region32
      $region31: #{tpu_custom_call.1} parent=5 // pred_region
        // Predicated region
        $region33: #{tpu_custom_call.1} parent=31 // pred_check
          %p235 = pneg %p49
        $region34: #{tpu_custom_call.1} parent=31 // pred_check_branch
          %237 = sbr.rel (%p235) target = $region36
        $region35: #{tpu_custom_call.1} parent=31 // pred_region
          %s238 = sadd.s32 %s22, %s23
          %s239 = smul.u32 16, %s238
          %p240 = scmp.lt.s32.totalorder %s239, 31
          %s241 = scalar_select %p240, %s239, 31
          %s242 = smul.addr %s241, 8
          %s243 = scalar_lea.vmem %s0, %s242
          %s244 = sadd.s32 %s22, %s23
          %s245 = smul.u32 16, %s244
        $region36: #{tpu_custom_call.1} parent=31 // pred_fallthru
          _
        // Predicated region
        $region37: #{tpu_custom_call.1} parent=31 // pred_check
          %p246 = pneg %p77
        $region38: #{tpu_custom_call.1} parent=31 // pred_check_branch
          %248 = sbr.rel (%p246) target = $region40
        $region39: #{tpu_custom_call.1} parent=31 // pred_region
          %s249 = sadd.s32 %s22, %s23
          %p250 = scmp.lt.s32.totalorder %s249, 1
          %s251 = scalar_select %p250, %s249, 1
          %s252 = scalar_lea.vmem %s1, %s251
          %s253 = sadd.s32 %s22, %s23
        $region40: #{tpu_custom_call.1} parent=31 // pred_fallthru
          _
      $region32: #{tpu_custom_call.1} parent=5 // pred_fallthru
        _
      %p254 = scmp.le.s32.totalorder 1, %s15
      %p255 = scmp.lt.s32.totalorder %s15, 3
      %p256 = pnand %p254, %p255
      %p257 = pneg %p256
      // Predicated region
      $region41: #{tpu_custom_call.1} parent=5 // pred_check
        _
      $region42: #{tpu_custom_call.1} parent=5 // pred_check_branch
        %259 = sbr.rel (%p256) target = $region44
      $region43: #{tpu_custom_call.1} parent=5 // pred_region
        %s260 = ssub.s32 %s15, 1
        // Predicated region
        $region45: #{tpu_custom_call.1} parent=43 // pred_check
          %p261 = pneg %p104
        $region46: #{tpu_custom_call.1} parent=43 // pred_check_branch
          %263 = sbr.rel (%p261) target = $region48
        $region47: #{tpu_custom_call.1} parent=43 // pred_region
          %265 = dma.done [#allocation5], 1024
        $region48: #{tpu_custom_call.1} parent=43 // pred_fallthru
          _
        %s266 = sadd.s32 %s24, %s25
        %s267 = smul.u32 16, %s266
        %p268 = scmp.lt.s32.totalorder %s267, 31
        %s269 = scalar_select %p268, %s267, 31
        %s270 = smul.addr %s269, 8
        %s271 = scalar_lea.vmem %s0, %s270
        %p272 = pneg %p55
        %p273 = pneg %p52
        %s274 = sadd.s32 %s24, %s25
        %p275 = scmp.lt.s32.totalorder %s274, 1
        %s276 = scalar_select %p275, %s274, 1
        %s277 = scalar_lea.vmem %s1, %s276
        %p278 = pneg %p83
        %p279 = pneg %p80
        %p280 = pneg %p104
        %p281 = pneg %p101
        %p282 = pneg %p125
        %p283 = pneg %p122
        %p284 = pneg %p146
        %p285 = pneg %p143
        %p286 = pneg %p167
        %p287 = pneg %p164
        %p288 = pneg %p193
        %p289 = pneg %p190
        %p290 = scmp.lt.s32.totalorder %s24, 1
        %s291 = scalar_select %p290, %s24, 1
        %s292 = scalar_lea.vmem %s6, %s291
        %s293 = sadd.s32 %s24, %s25
        %s294 = smul.u32 16, %s293
        %p295 = scmp.lt.s32.totalorder %s294, 31
        %s296 = scalar_select %p295, %s294, 31
        %s297 = smul.addr %s296, 8
        %s298 = scalar_lea.vmem %s0, %s297
        %s299 = sadd.s32 %s24, %s25
        %s300 = smul.u32 16, %s299
        %s301 = sadd.s32 %s24, %s25
        %p302 = scmp.lt.s32.totalorder %s301, 1
        %s303 = scalar_select %p302, %s301, 1
        %s304 = scalar_lea.vmem %s1, %s303
        %s305 = sadd.s32 %s24, %s25
        %p306 = scmp.lt.s32.totalorder %s24, 1
        %s307 = scalar_select %p306, %s24, 1
        %s308 = scalar_lea.vmem %s6, %s307
        %p309 = scmp.eq.s32.totalorder %s25, 0
        // Predicated region
        $region49: #{tpu_custom_call.1} parent=43 // pred_check
          %p310 = pneg %p309
        $region50: #{tpu_custom_call.1} parent=43 // pred_check_branch
          %312 = sbr.rel (%p310) target = $region52
        $region51: #{tpu_custom_call.1} parent=43 // pred_region
          %313 = vst [vmem:[#allocation2] sm:$0x1] 0.0
        $region52: #{tpu_custom_call.1} parent=43 // pred_fallthru
          _
        %v314 = vld [vmem:[%s298] sm:$0xff]
        %v315 = vld [vmem:[%s298 + $0x8] sm:$0xff]
        %v316 = vld [vmem:[%s298 + $0x10] sm:$0xff]
        %v317 = vld [vmem:[%s298 + $0x18] sm:$0xff]
        %v318 = vld [vmem:[%s298 + $0x20] sm:$0xff]
        %v319 = vld [vmem:[%s298 + $0x28] sm:$0xff]
        %v320 = vld [vmem:[%s298 + $0x30] sm:$0xff]
        %v321 = vld [vmem:[%s298 + $0x38] sm:$0xff]
        %v322 = vld [vmem:[%s298 + $0x40] sm:$0xff]
        %v323 = vld [vmem:[%s298 + $0x48] sm:$0xff]
        %v324 = vld [vmem:[%s298 + $0x50] sm:$0xff]
        %v325 = vld [vmem:[%s298 + $0x58] sm:$0xff]
        %v326 = vld [vmem:[%s298 + $0x60] sm:$0xff]
        %v327 = vld [vmem:[%s298 + $0x68] sm:$0xff]
        %v328 = vld [vmem:[%s298 + $0x70] sm:$0xff]
        %v329 = vld [vmem:[%s298 + $0x78] sm:$0xff]
        %v330 = vpack.c.bf16 %v315, %v314
        %v331 = vpack.c.bf16 %v317, %v316
        %v332 = vpack.c.bf16 %v319, %v318
        %v333 = vpack.c.bf16 %v321, %v320
        %v334 = vpack.c.bf16 %v323, %v322
        %v335 = vpack.c.bf16 %v325, %v324
        %v336 = vpack.c.bf16 %v327, %v326
        %v337 = vpack.c.bf16 %v329, %v328
        %v338 = vld [vmem:[#allocation4] sm:$0xf]
        %v339 = vld [vmem:[#allocation4 + $0x4] sm:$0xf]
        %v340 = vld [vmem:[#allocation4 + $0x8] sm:$0xf]
        %v341 = vld [vmem:[#allocation4 + $0xc] sm:$0xf]
        %v342 = vld [vmem:[#allocation4 + $0x10] sm:$0xf]
        %v343 = vld [vmem:[#allocation4 + $0x14] sm:$0xf]
        %v344 = vld [vmem:[#allocation4 + $0x18] sm:$0xf]
        %v345 = vld [vmem:[#allocation4 + $0x1c] sm:$0xf]
        %v346 = vld [vmem:[#allocation4 + $0x20] sm:$0xf]
        %v347 = vld [vmem:[#allocation4 + $0x24] sm:$0xf]
        %v348 = vld [vmem:[#allocation4 + $0x28] sm:$0xf]
        %v349 = vld [vmem:[#allocation4 + $0x2c] sm:$0xf]
        %v350 = vld [vmem:[#allocation4 + $0x30] sm:$0xf]
        %v351 = vld [vmem:[#allocation4 + $0x34] sm:$0xf]
        %v352 = vld [vmem:[#allocation4 + $0x38] sm:$0xf]
        %v353 = vld [vmem:[#allocation4 + $0x3c] sm:$0xf]
        %v354 = vld [vmem:[%s3] sm:$0xff]
        %v355 = vld [vmem:[%s3 + $0x8] sm:$0xff]
        %v356 = vld [vmem:[%s3 + $0x10] sm:$0xff]
        %v357 = vld [vmem:[%s3 + $0x18] sm:$0xff]
        %v358 = vld [vmem:[%s3 + $0x20] sm:$0xff]
        %v359 = vld [vmem:[%s3 + $0x28] sm:$0xff]
        %v360 = vld [vmem:[%s3 + $0x30] sm:$0xff]
        %v361 = vld [vmem:[%s3 + $0x38] sm:$0xff]
        %v362 = vld [vmem:[%s3 + $0x40] sm:$0xff]
        %v363 = vld [vmem:[%s3 + $0x48] sm:$0xff]
        %v364 = vld [vmem:[%s3 + $0x50] sm:$0xff]
        %v365 = vld [vmem:[%s3 + $0x58] sm:$0xff]
        %v366 = vld [vmem:[%s3 + $0x60] sm:$0xff]
        %v367 = vld [vmem:[%s3 + $0x68] sm:$0xff]
        %v368 = vld [vmem:[%s3 + $0x70] sm:$0xff]
        %v369 = vld [vmem:[%s3 + $0x78] sm:$0xff]
        %371 = vset.pattern.permute.xlu0 0
        %372 = vperm.xlu0 %371, %v354
        %v373 = vpop.permute.xlu0 %372
        %376 = vset.pattern.permute.xlu0 0
        %377 = vperm.xlu0 %376, %v355
        %v378 = vpop.permute.xlu0 %377
        %381 = vset.pattern.permute.xlu0 0
        %382 = vperm.xlu0 %381, %v356
        %v383 = vpop.permute.xlu0 %382
        %386 = vset.pattern.permute.xlu0 0
        %387 = vperm.xlu0 %386, %v357
        %v388 = vpop.permute.xlu0 %387
        %391 = vset.pattern.permute.xlu0 0
        %392 = vperm.xlu0 %391, %v358
        %v393 = vpop.permute.xlu0 %392
        %396 = vset.pattern.permute.xlu0 0
        %397 = vperm.xlu0 %396, %v359
        %v398 = vpop.permute.xlu0 %397
        %401 = vset.pattern.permute.xlu0 0
        %402 = vperm.xlu0 %401, %v360
        %v403 = vpop.permute.xlu0 %402
        %406 = vset.pattern.permute.xlu0 0
        %407 = vperm.xlu0 %406, %v361
        %v408 = vpop.permute.xlu0 %407
        %411 = vset.pattern.permute.xlu0 0
        %412 = vperm.xlu0 %411, %v362
        %v413 = vpop.permute.xlu0 %412
        %416 = vset.pattern.permute.xlu0 0
        %417 = vperm.xlu0 %416, %v363
        %v418 = vpop.permute.xlu0 %417
        %421 = vset.pattern.permute.xlu0 0
        %422 = vperm.xlu0 %421, %v364
        %v423 = vpop.permute.xlu0 %422
        %426 = vset.pattern.permute.xlu0 0
        %427 = vperm.xlu0 %426, %v365
        %v428 = vpop.permute.xlu0 %427
        %431 = vset.pattern.permute.xlu0 0
        %432 = vperm.xlu0 %431, %v366
        %v433 = vpop.permute.xlu0 %432
        %436 = vset.pattern.permute.xlu0 0
        %437 = vperm.xlu0 %436, %v367
        %v438 = vpop.permute.xlu0 %437
        %441 = vset.pattern.permute.xlu0 0
        %442 = vperm.xlu0 %441, %v368
        %v443 = vpop.permute.xlu0 %442
        %446 = vset.pattern.permute.xlu0 0
        %447 = vperm.xlu0 %446, %v369
        %v448 = vpop.permute.xlu0 %447
        %v466 = vunpack.c.l.b16 %v338
        %v467 = vunpack.c.l.b16 %v339
        %v468 = vunpack.c.l.b16 %v340
        %v469 = vunpack.c.l.b16 %v341
        %v470 = vunpack.c.l.b16 %v342
        %v471 = vunpack.c.l.b16 %v343
        %v472 = vunpack.c.l.b16 %v344
        %v473 = vunpack.c.l.b16 %v345
        %v474 = vunpack.c.l.b16 %v346
        %v475 = vunpack.c.l.b16 %v347
        %v476 = vunpack.c.l.b16 %v348
        %v477 = vunpack.c.l.b16 %v349
        %v478 = vunpack.c.l.b16 %v350
        %v479 = vunpack.c.l.b16 %v351
        %v480 = vunpack.c.l.b16 %v352
        %v481 = vunpack.c.l.b16 %v353
        %v482 = vpack.c.b16 %v467, %v466
        %v483 = vpack.c.b16 %v469, %v468
        %v484 = vpack.c.b16 %v471, %v470
        %v485 = vpack.c.b16 %v473, %v472
        %v486 = vpack.c.b16 %v475, %v474
        %v487 = vpack.c.b16 %v477, %v476
        %v488 = vpack.c.b16 %v479, %v478
        %v489 = vpack.c.b16 %v481, %v480
        %498 = vmatpush.bf16.xpose.msra.mxu0 %v337
        %499 = vmatpush.bf16.xpose.msra.mxu0 %v336
        %500 = vmatpush.bf16.xpose.msra.mxu0 %v335
        %501 = vmatpush.bf16.xpose.msra.mxu0 %v334
        %502 = vmatpush.bf16.xpose.msra.mxu0 %v333
        %503 = vmatpush.bf16.xpose.msra.mxu0 %v332
        %504 = vmatpush.bf16.xpose.msra.mxu0 %v331
        %505 = vmatpush.bf16.xpose.msra.mxu0 %v330
        %506 = vmatmul.bf16.gmra.mxu0 %v482
        %v507 = vpop.f32.mrf.mxu0
        %v508 = vadd.f32 %v373, %v507
        %v509 = vpop.f32.mrf.mxu0
        %v510 = vadd.f32 %v378, %v509
        %511 = vmatmul.bf16.gmra.mxu0 %v483
        %v512 = vpop.f32.mrf.mxu0
        %v513 = vadd.f32 %v383, %v512
        %v514 = vpop.f32.mrf.mxu0
        %v515 = vadd.f32 %v388, %v514
        %516 = vmatmul.bf16.gmra.mxu0 %v484
        %v517 = vpop.f32.mrf.mxu0
        %v518 = vadd.f32 %v393, %v517
        %v519 = vpop.f32.mrf.mxu0
        %v520 = vadd.f32 %v398, %v519
        %521 = vmatmul.bf16.gmra.mxu0 %v485
        %v522 = vpop.f32.mrf.mxu0
        %v523 = vadd.f32 %v403, %v522
        %v524 = vpop.f32.mrf.mxu0
        %v525 = vadd.f32 %v408, %v524
        %526 = vmatmul.bf16.gmra.mxu0 %v486
        %v527 = vpop.f32.mrf.mxu0
        %v528 = vadd.f32 %v413, %v527
        %v529 = vpop.f32.mrf.mxu0
        %v530 = vadd.f32 %v418, %v529
        %531 = vmatmul.bf16.gmra.mxu0 %v487
        %v532 = vpop.f32.mrf.mxu0
        %v533 = vadd.f32 %v423, %v532
        %v534 = vpop.f32.mrf.mxu0
        %v535 = vadd.f32 %v428, %v534
        %536 = vmatmul.bf16.gmra.mxu0 %v488
        %v537 = vpop.f32.mrf.mxu0
        %v538 = vadd.f32 %v433, %v537
        %v539 = vpop.f32.mrf.mxu0
        %v540 = vadd.f32 %v438, %v539
        %541 = vmatmul.bf16.gmra.mxu0 %v489
        %v542 = vpop.f32.mrf.mxu0
        %v543 = vadd.f32 %v443, %v542
        %v544 = vpop.f32.mrf.mxu0
        %v545 = vadd.f32 %v448, %v544
        %546 = vdwg.mxu0
        %v547 = vmax.f32 %v508, 0.0
        %v548 = vmax.f32 %v510, 0.0
        %v549 = vmax.f32 %v513, 0.0
        %v550 = vmax.f32 %v515, 0.0
        %v551 = vmax.f32 %v518, 0.0
        %v552 = vmax.f32 %v520, 0.0
        %v553 = vmax.f32 %v523, 0.0
        %v554 = vmax.f32 %v525, 0.0
        %v555 = vmax.f32 %v528, 0.0
        %v556 = vmax.f32 %v530, 0.0
        %v557 = vmax.f32 %v533, 0.0
        %v558 = vmax.f32 %v535, 0.0
        %v559 = vmax.f32 %v538, 0.0
        %v560 = vmax.f32 %v540, 0.0
        %v561 = vmax.f32 %v543, 0.0
        %v562 = vmax.f32 %v545, 0.0
        %v563 = vld [vmem:[%s4] sm:$0xff]
        %v564 = vld [vmem:[%s4 + $0x8] sm:$0xff]
        %v565 = vld [vmem:[%s4 + $0x10] sm:$0xff]
        %v566 = vld [vmem:[%s4 + $0x18] sm:$0xff]
        %v567 = vld [vmem:[%s4 + $0x20] sm:$0xff]
        %v568 = vld [vmem:[%s4 + $0x28] sm:$0xff]
        %v569 = vld [vmem:[%s4 + $0x30] sm:$0xff]
        %v570 = vld [vmem:[%s4 + $0x38] sm:$0xff]
        %v571 = vld [vmem:[%s4 + $0x40] sm:$0xff]
        %v572 = vld [vmem:[%s4 + $0x48] sm:$0xff]
        %v573 = vld [vmem:[%s4 + $0x50] sm:$0xff]
        %v574 = vld [vmem:[%s4 + $0x58] sm:$0xff]
        %v575 = vld [vmem:[%s4 + $0x60] sm:$0xff]
        %v576 = vld [vmem:[%s4 + $0x68] sm:$0xff]
        %v577 = vld [vmem:[%s4 + $0x70] sm:$0xff]
        %v578 = vld [vmem:[%s4 + $0x78] sm:$0xff]
        %580 = vset.pattern.permute.xlu0 0
        %581 = vperm.xlu0 %580, %v563
        %v582 = vpop.permute.xlu0 %581
        %585 = vset.pattern.permute.xlu0 0
        %586 = vperm.xlu0 %585, %v564
        %v587 = vpop.permute.xlu0 %586
        %590 = vset.pattern.permute.xlu0 0
        %591 = vperm.xlu0 %590, %v565
        %v592 = vpop.permute.xlu0 %591
        %595 = vset.pattern.permute.xlu0 0
        %596 = vperm.xlu0 %595, %v566
        %v597 = vpop.permute.xlu0 %596
        %600 = vset.pattern.permute.xlu0 0
        %601 = vperm.xlu0 %600, %v567
        %v602 = vpop.permute.xlu0 %601
        %605 = vset.pattern.permute.xlu0 0
        %606 = vperm.xlu0 %605, %v568
        %v607 = vpop.permute.xlu0 %606
        %610 = vset.pattern.permute.xlu0 0
        %611 = vperm.xlu0 %610, %v569
        %v612 = vpop.permute.xlu0 %611
        %615 = vset.pattern.permute.xlu0 0
        %616 = vperm.xlu0 %615, %v570
        %v617 = vpop.permute.xlu0 %616
        %620 = vset.pattern.permute.xlu0 0
        %621 = vperm.xlu0 %620, %v571
        %v622 = vpop.permute.xlu0 %621
        %625 = vset.pattern.permute.xlu0 0
        %626 = vperm.xlu0 %625, %v572
        %v627 = vpop.permute.xlu0 %626
        %630 = vset.pattern.permute.xlu0 0
        %631 = vperm.xlu0 %630, %v573
        %v632 = vpop.permute.xlu0 %631
        %635 = vset.pattern.permute.xlu0 0
        %636 = vperm.xlu0 %635, %v574
        %v637 = vpop.permute.xlu0 %636
        %640 = vset.pattern.permute.xlu0 0
        %641 = vperm.xlu0 %640, %v575
        %v642 = vpop.permute.xlu0 %641
        %645 = vset.pattern.permute.xlu0 0
        %646 = vperm.xlu0 %645, %v576
        %v647 = vpop.permute.xlu0 %646
        %650 = vset.pattern.permute.xlu0 0
        %651 = vperm.xlu0 %650, %v577
        %v652 = vpop.permute.xlu0 %651
        %655 = vset.pattern.permute.xlu0 0
        %656 = vperm.xlu0 %655, %v578
        %v657 = vpop.permute.xlu0 %656
        %v659 = vmul.f32 %v547, %v582
        %v660 = vmul.f32 %v548, %v587
        %v661 = vmul.f32 %v549, %v592
        %v662 = vmul.f32 %v550, %v597
        %v663 = vmul.f32 %v551, %v602
        %v664 = vmul.f32 %v552, %v607
        %v665 = vmul.f32 %v553, %v612
        %v666 = vmul.f32 %v554, %v617
        %v667 = vmul.f32 %v555, %v622
        %v668 = vmul.f32 %v556, %v627
        %v669 = vmul.f32 %v557, %v632
        %v670 = vmul.f32 %v558, %v637
        %v671 = vmul.f32 %v559, %v642
        %v672 = vmul.f32 %v560, %v647
        %v673 = vmul.f32 %v561, %v652
        %v674 = vmul.f32 %v562, %v657
        %v675 = vadd.f32 %v659, %v660
        %v676 = vadd.f32 %v675, %v661
        %v677 = vadd.f32 %v676, %v662
        %v678 = vadd.f32 %v677, %v663
        %v679 = vadd.f32 %v678, %v664
        %v680 = vadd.f32 %v679, %v665
        %v681 = vadd.f32 %v680, %v666
        %v682 = vadd.f32 %v681, %v667
        %v683 = vadd.f32 %v682, %v668
        %v684 = vadd.f32 %v683, %v669
        %v685 = vadd.f32 %v684, %v670
        %v686 = vadd.f32 %v685, %v671
        %v687 = vadd.f32 %v686, %v672
        %v688 = vadd.f32 %v687, %v673
        %v689 = vadd.f32 %v688, %v674
        %v690 = vrot.slane %v689, 4
        %v691 = vadd.f32 %v689, %v690
        %v692 = vrot.slane %v691, 2
        %v693 = vadd.f32 %v691, %v692
        %v694 = vrot.slane %v693, 1
        %v695 = vadd.f32 %v693, %v694
        %v696 = vld [vmem:[#allocation3] sm:$0x1]
        %698 = vset.pattern.permute.xlu0 0
        %699 = vperm.xlu0 %698, %v696
        %v700 = vpop.permute.xlu0 %699
        %v702 = vperm.slane %v700, 0
        %v703 = vadd.f32 %v695, %v702
        %v704 = vld [vmem:[%s304] sm:$0x1]
        %v705 = vmax.f32 %v703, 0.0
        %v706 = vmul.f32 %v703, %v704
        %v707 = vsub.f32 %v705, %v706
        %v708 = vand.u32 2147483647, %v703
        %v709 = vsub.f32 0.0, %v708
        %v710 = vmul.f32 %v709, 1.442695
        %v711 = vpow.pop %v710
        %v712 = vadd.f32 %v711, 1.0
        %v713 = vlog2.pop %v712
        %v714 = vmul.f32 %v713, 0.6931472
        %v715 = vmul.f32 -0.5, %v711
        %v716 = vadd.f32 %v715, 1.0
        %v717 = vmul.f32 %v716, %v711
        %v718 = vand.u32 2147483647, %v711
        %vm719 = vcmp.lt.f32.partialorder %v718, 0.0004427343
        %v720 = vsel %vm719, %v717, %v714
        %v721 = vadd.f32 %v707, %v720
        %v722 = vld [vmem:[#allocation2] sm:$0x1]
        %v723 = vadd.f32 %v722, %v721
        %724 = vst [vmem:[#allocation2] sm:$0x1] %v723
        // Predicated region
        $region53: #{tpu_custom_call.1} parent=43 // pred_check
          %p725 = pneg %p309
        $region54: #{tpu_custom_call.1} parent=43 // pred_check_branch
          %727 = sbr.rel (%p725) target = $region56
        $region55: #{tpu_custom_call.1} parent=43 // pred_region
          %v728 = vld [vmem:[#allocation2] sm:$0x1]
          %vm729 = vcmask 1040384
          %v730 = vsel %vm729, %v728, 0.0
          %731 = vadd.xlane.f32.xlu0 %v730
          %v732 = vpop.xlane.xlu0 %731
          %v733 = vmul.f32 %v732, 0.00390625
          %vm734 = vcmask 0
          %735 = vst.msk [vmem:[%s308] sm:$0x1] %vm734, %v733
        $region56: #{tpu_custom_call.1} parent=43 // pred_fallthru
          _
        %p736 = scmp.lt.s32.totalorder %s24, 1
        %s737 = scalar_select %p736, %s24, 1
        %s738 = scalar_lea.vmem %s6, %s737
        // Predicated region
        $region57: #{tpu_custom_call.1} parent=43 // pred_check
          %p739 = pneg %p190
        $region58: #{tpu_custom_call.1} parent=43 // pred_check_branch
          %741 = sbr.rel (%p739) target = $region60
        $region59: #{tpu_custom_call.1} parent=43 // pred_region
          _
        $region60: #{tpu_custom_call.1} parent=43 // pred_fallthru
          _
      $region44: #{tpu_custom_call.1} parent=5 // pred_fallthru
        _
      %p742 = scmp.le.s32.totalorder 2, %s15
      // Predicated region
      $region61: #{tpu_custom_call.1} parent=5 // pred_check
        %p743 = pneg %p742
      $region62: #{tpu_custom_call.1} parent=5 // pred_check_branch
        %745 = sbr.rel (%p743) target = $region64
      $region63: #{tpu_custom_call.1} parent=5 // pred_region
        %s746 = ssub.s32 %s15, 2
        // Predicated region
        $region65: #{tpu_custom_call.1} parent=63 // pred_check
          %p747 = pneg %p196
        $region66: #{tpu_custom_call.1} parent=63 // pred_check_branch
          %749 = sbr.rel (%p747) target = $region68
        $region67: #{tpu_custom_call.1} parent=63 // pred_region
          %p750 = scmp.lt.s32.totalorder %s26, 1
          %s751 = scalar_select %p750, %s26, 1
          %s752 = scalar_lea.vmem %s6, %s751
        $region68: #{tpu_custom_call.1} parent=63 // pred_fallthru
          _
      $region64: #{tpu_custom_call.1} parent=5 // pred_fallthru
        _
    $region6: #{tpu_custom_call.1} parent=1 // loop_footer
      %s19 = sadd.s32 1, %s15
    $region7: #{tpu_custom_call.1} parent=1 // loop_footer_branch
      %14 = sbr.rel target = $region3
    $region8: #{tpu_custom_call.1} parent=1 // loop_exit
      _
    %753 = vsyncpa [#allocation5], 1
    %s754 = scalar_lea.sflag [#allocation5], 1
    %755 = vsyncpa %s754, 1

</llo_original>
